<compile_context>
chip_gen: v6e
topology: v6e:2x2x1
jax: 0.10.0
libtpu: 0.0.40
codegen_flags: <defaults>
</compile_context>

<pallas_src>
import functools

import numpy as np
import jax
import jax.numpy as jnp
from jax.experimental import pallas as pl
from jax.experimental.pallas import tpu as pltpu

LANE = 128
HEADS_PAD = 128  # columns 0:2 = QA start/end head, 2:4 = no-answer classifier, rest zero


def _round_up(a, b):
    return (a + b - 1) // b * b


# ----------------------------------------------------------------------------
# Per-generation tuning (VMEM capacity drives the projector row tile / limit).
# ----------------------------------------------------------------------------
def _vmem_capacity_bytes():
    """Best-effort per-core VMEM capacity; conservative 64 MiB if unknown."""
    try:
        info = pltpu.get_tpu_info()
        for name in ("vmem_capacity_bytes", "vmem_bytes", "vmem_size_bytes"):
            v = getattr(info, name, None)
            if v:
                return int(v)
    except Exception:
        pass
    try:
        kind = jax.devices()[0].device_kind.lower()
        if ("v7" in kind) or ("7x" in kind) or ("tpu7" in kind):
            return 64 * 1024 * 1024
        if any(t in kind for t in ("v4", "v5", "v6")):
            return 128 * 1024 * 1024
    except Exception:
        pass
    return 64 * 1024 * 1024


def _projector_config():
    """Returns (tm_max, vmem_limit_bytes).

    128-MiB parts (v5e/v6e): tm=256 fills the 256-row MXU and halves how often the
    full projector weight is re-streamed when R > 128.  64-MiB parts (v7x): stay at
    tm=128 (the f32 output double-buffer at tm=256 alone is ~63 MiB) but raise the
    scoped-VMEM limit so the pipelined buffers still fit.
    """
    cap = _vmem_capacity_bytes()
    if cap >= 96 * 1024 * 1024:
        return 256, min(100 * 1024 * 1024, cap - 16 * 1024 * 1024)
    return 128, min(52 * 1024 * 1024, max(40 * 1024 * 1024, cap - 12 * 1024 * 1024))


# ----------------------------------------------------------------------------
# One-time parameter preparation (hoisted out of the forward pass).
# ----------------------------------------------------------------------------
def prepare_params(raw, *, tv=2048):
    """Pads / casts / tiles the weights once at load time."""
    H, V = raw["w_proj"].shape
    V_pad = _round_up(V, tv)
    nj = V_pad // tv

    # Projector weight: bf16, padded on the vocab axis, pre-reshaped into contiguous
    # (nj, H, tv) tiles so each manual DMA is a single contiguous transfer.
    w_pad = jnp.zeros((H, V_pad), jnp.bfloat16).at[:, :V].set(
        raw["w_proj"].astype(jnp.bfloat16))
    w_proj_tiles = jnp.transpose(w_pad.reshape(H, nj, tv), (1, 0, 2))  # (nj, H, tv)

    # Bias stays f32; padded vocab columns get -1e30 so exp(...) == 0 after max-subtract.
    b_proj_pad = jnp.full((1, V_pad), -1e30, jnp.float32).at[0, :V].set(
        raw["b_proj"].astype(jnp.float32))

    # Merged lane-dense head weight: [w_qa | w_cls | zeros].
    w_heads = (jnp.zeros((H, HEADS_PAD), jnp.float32)
               .at[:, 0:2].set(raw["w_qa"])
               .at[:, 2:4].set(raw["w_cls"]))
    b_heads = (jnp.zeros((1, HEADS_PAD), jnp.float32)
               .at[0, 0:2].set(raw["b_qa"].reshape(-1))
               .at[0, 2:4].set(raw["b_cls"].reshape(-1)))

    return {"w_proj_tiles": w_proj_tiles, "b_proj_pad": b_proj_pad,
            "w_heads": w_heads, "b_heads": b_heads,
            "V": V, "V_pad": V_pad, "nj": nj, "tv": tv, "H": H}


# ----------------------------------------------------------------------------
# Kernel 1: merged QA start/end head + "no answer" classifier.
# One lane-dense (H, 128) matmul per batch row, fed straight from the 3-D layout.
# ----------------------------------------------------------------------------
def heads_kernel(tok_ref, w_ref, b_ref, o_ref):
    o_ref[0] = (jnp.dot(tok_ref[0], w_ref[...],
                        preferred_element_type=jnp.float32) + b_ref[...])


def run_heads(contextual, w_heads, b_heads):
    B, S, H = contextual.shape
    return pl.pallas_call(
        heads_kernel,
        out_shape=jax.ShapeDtypeStruct((B, S, HEADS_PAD), jnp.float32),
        grid_spec=pltpu.PrefetchScalarGridSpec(
            num_scalar_prefetch=0,
            grid=(B,),
            in_specs=[pl.BlockSpec((1, S, H), lambda b: (b, 0, 0)),
                      pl.BlockSpec((H, HEADS_PAD), lambda b: (0, 0)),
                      pl.BlockSpec((1, HEADS_PAD), lambda b: (0, 0))],
            out_specs=pl.BlockSpec((1, S, HEADS_PAD), lambda b: (b, 0, 0))),
        compiler_params=pltpu.CompilerParams(dimension_semantics=("parallel",)),
    )(contextual, w_heads, b_heads)


# ----------------------------------------------------------------------------
# Kernel 2 (hot path): projector Linear(hidden, 30522) fused with Softmax(dim=1).
# Grid over row tiles; vocab axis tiled in-kernel with manually double-buffered
# bf16 weight DMA from HBM. Online softmax: pass 1 stores exp(logits - m_running)
# under the DMA shadow; a single correction sweep rescales by exp(m_j - m_final)/s.
# ----------------------------------------------------------------------------
def proj_softmax_kernel(x_ref, b_ref, w_hbm, o_ref, wbuf, sem, mj_ref, *, nj, tv):
    def dma(jj, slot):
        return pltpu.make_async_copy(w_hbm.at[jj], wbuf.at[slot], sem.at[slot])

    dma(0, 0).start()                      # prime the weight pipeline
    x = x_ref[...]                         # (tm, H) bf16
    tm = x.shape[0]
    m = jnp.full((tm, 1), -jnp.inf, jnp.float32)
    s = jnp.zeros((tm, 1), jnp.float32)

    # Pass 1 (weight-DMA bound): stream tiles, online max/sum, store exp(logits - m_j).
    # Kept statically unrolled so the DMA start/wait schedule stays visible to the
    # scheduler; the exp rides the otherwise-idle EUP slot.
    for jj in range(nj):
        slot = jj % 2
        dma(jj, slot).wait()
        if jj + 1 < nj:
            dma(jj + 1, 1 - slot).start()
        sl = slice(jj * tv, (jj + 1) * tv)
        logits = jnp.dot(x, wbuf[slot], preferred_element_type=jnp.float32) + b_ref[:, sl]
        m_new = jnp.maximum(m, jnp.max(logits, axis=-1, keepdims=True))
        e = jnp.exp(logits - m_new)
        s = s * jnp.exp(m - m_new) + jnp.sum(e, axis=-1, keepdims=True)
        o_ref[:, sl] = e                   # lane-dense, static 128-aligned store
        mj_ref[jj] = m_new                 # per-tile running max -> small VMEM scratch
        m = m_new

    # Pass 2: single correction sweep o_j *= exp(m_j - m_final) * (1/s).
    # Static lane slices keep addressing static and stores unmasked; per-iteration
    # live temporaries are one (tm, tv) tile, so unrolling nj is cheap.
    inv = pl.reciprocal(s, approx=False)
    for jj in range(nj):
        sl = slice(jj * tv, (jj + 1) * tv)
        corr = jnp.exp(mj_ref[jj] - m) * inv
        o_ref[:, sl] = o_ref[:, sl] * corr


def projector_softmax_padded(x, prep, *, tm_max=None, vmem_limit=None):
    """x: (R, H) float rows -> padded (R_pad, V_pad) softmax probabilities.

    Padded vocab columns are exactly 0 (bias -1e30) and padded rows are discardable;
    callers slice [:R, :V] (ideally fused into their consumer) — the kernel never trims.
    """
    R, H = x.shape
    V_pad, nj, tv = prep["V_pad"], prep["nj"], prep["tv"]
    if tm_max is None or vmem_limit is None:
        cfg_tm, cfg_vmem = _projector_config()
        tm_max = tm_max or cfg_tm
        vmem_limit = vmem_limit or cfg_vmem
    tm = min(tm_max, max(8, _round_up(R, 8)))
    R_pad = max(tm, _round_up(R, tm))
    x_pad = jnp.zeros((R_pad, H), jnp.bfloat16)
    if R > 0:
        x_pad = x_pad.at[:R].set(x.astype(jnp.bfloat16))

    return pl.pallas_call(
        functools.partial(proj_softmax_kernel, nj=nj, tv=tv),
        out_shape=jax.ShapeDtypeStruct((R_pad, V_pad), jnp.float32),
        grid_spec=pltpu.PrefetchScalarGridSpec(
            num_scalar_prefetch=0,
            grid=(R_pad // tm,),
            in_specs=[pl.BlockSpec((tm, H), lambda i: (i, 0)),
                      pl.BlockSpec((1, V_pad), lambda i: (0, 0)),
                      pl.BlockSpec(memory_space=pl.ANY)],      # weight tiles stay in HBM
            out_specs=pl.BlockSpec((tm, V_pad), lambda i: (i, 0)),
            scratch_shapes=[pltpu.VMEM((2, H, tv), jnp.bfloat16),   # dbl-buffered weight
                            pltpu.SemaphoreType.DMA((2,)),
                            pltpu.VMEM((nj, tm, 1), jnp.float32)]),  # per-tile maxes
        compiler_params=pltpu.CompilerParams(
            dimension_semantics=("parallel",),
            vmem_limit_bytes=vmem_limit),
    )(x_pad, prep["b_proj_pad"], prep["w_proj_tiles"])


# ----------------------------------------------------------------------------
# Host-side glue mirroring the PyTorch CPU list code.
# ----------------------------------------------------------------------------
def convert_msk_index(begin_list, end_list, exception_list):
    idx_list, converted_list = [], []
    for i in range(len(end_list)):
        temp_list = []
        for idx in range(int(begin_list[i]), int(end_list[i]) + 1):
            if idx != -1 and idx not in exception_list:
                temp_list.append(idx)
            else:
                break
        if len(temp_list) > 0:
            idx_list.append(i)
            converted_list.append(temp_list)
    return idx_list, converted_list


def flat_output_gather(hidden, have_answer_idx, msk_index_converted):
    # Equivalent to AVEQA.flat_output: gather (batch_row, token_idx) pairs.
    gb, gt = [], []
    for pos, row in enumerate(have_answer_idx):
        for tok in msk_index_converted[pos]:
            gb.append(row)
            gt.append(tok)
    gb = jnp.asarray(gb, jnp.int32)
    gt = jnp.asarray(gt, jnp.int32)
    return hidden[gb, gt, :]


# ----------------------------------------------------------------------------
# Full forward (head portion of AVEQA.forward)
# ----------------------------------------------------------------------------
def aveqa_forward(contextual, bert_last, begin_label, end_label, prep):
    B, S, H = contextual.shape
    V = prep["V"]

    # QA head + no-answer classifier in one lane-dense matmul (Pallas kernel 1).
    heads = run_heads(contextual, prep["w_heads"], prep["b_heads"])   # (B, S, 128)
    start_logits = heads[..., 0]
    end_logits = heads[..., 1]
    no_answer = heads[:, 0, 2:4]          # [CLS] assumed at sequence position 0
    answer_start_index = jnp.argmax(start_logits, axis=-1)
    answer_end_index = jnp.argmax(end_logits, axis=-1)
    pred_label = jnp.argmax(no_answer, axis=1)

    # Mask-index conversion + token gather (host-side, data-dependent, like torch code).
    have_answer_list, msk_converted = convert_msk_index(
        np.asarray(begin_label), np.asarray(end_label), exception_list=[])
    bert_gt = flat_output_gather(bert_last, have_answer_list, msk_converted)        # (M, H)
    contextual_pred = flat_output_gather(contextual, have_answer_list, msk_converted)
    M = bert_gt.shape[0]

    # Projector + softmax: single fused streaming call over both gathered sets
    # (weight read from HBM once); slice only the consumed rows/cols from the padded
    # result (padded vocab columns are exactly zero).
    x_all = jnp.concatenate([bert_gt, contextual_pred], axis=0)       # (2M, H)
    y_all = projector_softmax_padded(x_all, prep)                     # (R_pad, V_pad)
    bert_gt_output = y_all[:M, :V]
    contextual_prediction_output = y_all[M:2 * M, :V]

    # TODO(synk): idx_begin/idx_end come from tokenizer/regex string matching in the
    # reference module; no tensor equivalent — begin/end labels are used as stand-ins.
    return {
        "no_answer_output": no_answer,
        "bert_gt_output": bert_gt_output,
        "contextual_prediction_output": contextual_prediction_output,
        "pred_begin_idx": answer_start_index,
        "pred_end_idx": answer_end_index,
        "pred_label": pred_label,
        "begin_label_ori": jnp.asarray(begin_label, jnp.float32),
        "end_label_ori": jnp.asarray(end_label, jnp.float32),
    }


if __name__ == "__main__":
    # Small shapes consistent with the forward (hidden shrunk from 768 -> 128).
    B, S, H, V = 2, 16, 128, 30522

    key = jax.random.PRNGKey(0)
    keys = jax.random.split(key, 6)

    # TODO(synk): pretrained BertModel / BertForQuestionAnswering encoders are not
    # reproducible in Pallas; synthetic last-hidden-states stand in for their outputs.
    contextual = jax.random.normal(keys[0], (B, S, H), jnp.float32)   # QA model hidden_states[-1]
    bert_last = jax.random.normal(keys[1], (B, S, H), jnp.float32)    # bert_model.last_hidden_state

    raw_params = {
        "w_cls": 0.02 * jax.random.normal(keys[2], (H, 2), jnp.float32),
        "b_cls": jnp.zeros((2,), jnp.float32),
        "w_qa": 0.02 * jax.random.normal(keys[3], (H, 2), jnp.float32),
        "b_qa": jnp.zeros((2,), jnp.float32),
        "w_proj": 0.02 * jax.random.normal(keys[4], (H, V), jnp.float32),
        "b_proj": jnp.zeros((V,), jnp.float32),
    }
    prep = jax.block_until_ready(prepare_params(raw_params))   # one-time weight prep

    # begin_label / end_label: batch 0 has answer span [3, 5], batch 1 has no answer.
    begin_label = np.array([3, -1], dtype=np.int32)
    end_label = np.array([5, -1], dtype=np.int32)

    out = aveqa_forward(contextual, bert_last, begin_label, end_label, prep)
    jax.block_until_ready(out)

    # ------------------------- numerical sanity checks -------------------------
    # Heads (f32 path): classifier on [CLS] and QA start logits.
    cls_ref = contextual[:, 0, :] @ raw_params["w_cls"] + raw_params["b_cls"]
    np.testing.assert_allclose(np.asarray(out["no_answer_output"]), np.asarray(cls_ref),
                               rtol=1e-4, atol=1e-5)
    qa_ref = (contextual.reshape(B * S, H) @ raw_params["w_qa"]
              + raw_params["b_qa"]).reshape(B, S, 2)
    np.testing.assert_allclose(np.asarray(out["pred_begin_idx"]),
                               np.asarray(jnp.argmax(qa_ref[..., 0], axis=-1)))

    # Projector + softmax (bf16 weight/activation, f32 accumulation) vs. JAX reference.
    have_idx, msk_conv = convert_msk_index(begin_label, end_label, [])
    bert_gt_in = flat_output_gather(bert_last, have_idx, msk_conv)
    ctx_in = flat_output_gather(contextual, have_idx, msk_conv)

    def proj_ref(x):
        logits = jnp.dot(x.astype(jnp.bfloat16),
                         raw_params["w_proj"].astype(jnp.bfloat16),
                         preferred_element_type=jnp.float32) + raw_params["b_proj"]
        return jax.nn.softmax(logits, axis=-1)

    np.testing.assert_allclose(np.asarray(out["bert_gt_output"]),
                               np.asarray(proj_ref(bert_gt_in)),
                               rtol=1e-3, atol=1e-7)
    np.testing.assert_allclose(np.asarray(out["contextual_prediction_output"]),
                               np.asarray(proj_ref(ctx_in)),
                               rtol=1e-3, atol=1e-7)
    # Softmax rows sum to 1 (over the real vocab columns).
    row_sums = np.asarray(out["bert_gt_output"]).sum(axis=1)
    np.testing.assert_allclose(row_sums, np.ones(row_sums.shape[0]), rtol=1e-5, atol=1e-5)

    print("KERNEL_OK")
</pallas_src>

<mosaic_0001>
module attributes {stable_mosaic.version = 11 : i64} {
  func.func @heads_kernel(%arg0: i32, %arg1: memref<1x16x128xf32, #tpu.memory_space<vmem>>, %arg2: memref<128x128xf32, #tpu.memory_space<vmem>>, %arg3: memref<1x128xf32, #tpu.memory_space<vmem>>, %arg4: memref<1x16x128xf32, #tpu.memory_space<vmem>>) attributes {dimension_semantics = [#tpu.dimension_semantics<parallel>], iteration_bounds = array<i64: 2>, scalar_prefetch = 0 : i64, scratch_operands = 0 : i64, tpu.core_type = #tpu.core_type<tc>, window_params = [{transform_indices = @transform_0, window_bounds = array<i64: 1, 16, 128>}, {pipeline_mode = #tpu.pipeline_mode<synchronous>, transform_indices = @transform_1, window_bounds = array<i64: 128, 128>}, {pipeline_mode = #tpu.pipeline_mode<synchronous>, transform_indices = @transform_2, window_bounds = array<i64: 1, 128>}, {transform_indices = @transform_3, window_bounds = array<i64: 1, 16, 128>}]} {
    %c0 = arith.constant 0 : index
    %c0_0 = arith.constant 0 : index
    %c0_1 = arith.constant 0 : index
    %0 = vector.load %arg1[%c0, %c0_0, %c0_1] : memref<1x16x128xf32, #tpu.memory_space<vmem>>, vector<1x16x128xf32>
    %1 = vector.shape_cast %0 : vector<1x16x128xf32> to vector<16x128xf32>
    %c0_2 = arith.constant 0 : index
    %c0_3 = arith.constant 0 : index
    %2 = vector.load %arg2[%c0_2, %c0_3] : memref<128x128xf32, #tpu.memory_space<vmem>>, vector<128x128xf32>
    %cst = arith.constant dense<0.000000e+00> : vector<16x128xf32>
    %3 = tpu.matmul %1, %2, %cst {dimension_numbers = #tpu.dot_dimension_numbers<[1], [0], [0], [1], [0, 0, 1, 1], [], []>} : vector<16x128xf32>, vector<128x128xf32>, vector<16x128xf32> -> vector<16x128xf32>
    %c0_4 = arith.constant 0 : index
    %c0_5 = arith.constant 0 : index
    %4 = vector.load %arg3[%c0_4, %c0_5] : memref<1x128xf32, #tpu.memory_space<vmem>>, vector<1x128xf32>
    %5 = vector.broadcast %4 : vector<1x128xf32> to vector<16x128xf32>
    %6 = arith.addf %3, %5 : vector<16x128xf32>
    %c0_6 = arith.constant 0 : index
    %c0_7 = arith.constant 0 : index
    %c0_8 = arith.constant 0 : index
    %7 = vector.load %arg4[%c0_6, %c0_7, %c0_8] : memref<1x16x128xf32, #tpu.memory_space<vmem>>, vector<1x16x128xf32>
    %8 = vector.shape_cast %7 : vector<1x16x128xf32> to vector<16x128xf32>
    %9 = vector.shape_cast %6 : vector<16x128xf32> to vector<1x16x128xf32>
    tpu.vector_store %arg4[%c0_6, %c0_7, %c0_8], %9 {strides = array<i32>} : memref<1x16x128xf32, #tpu.memory_space<vmem>>, vector<1x16x128xf32>,
    return
  }
  func.func @transform_0(%arg0: i32) -> (i32, i32, i32) {
    %c0_i32 = arith.constant 0 : i32
    %c0_i32_0 = arith.constant 0 : i32
    %c0_i32_1 = arith.constant 0 : i32
    return %arg0, %c0_i32, %c0_i32_0 : i32, i32, i32
  }
  func.func @transform_1(%arg0: i32) -> (i32, i32) {
    %c0_i32 = arith.constant 0 : i32
    %c0_i32_0 = arith.constant 0 : i32
    %c0_i32_1 = arith.constant 0 : i32
    return %c0_i32, %c0_i32_0 : i32, i32
  }
  func.func @transform_2(%arg0: i32) -> (i32, i32) {
    %c0_i32 = arith.constant 0 : i32
    %c0_i32_0 = arith.constant 0 : i32
    %c0_i32_1 = arith.constant 0 : i32
    return %c0_i32, %c0_i32_0 : i32, i32
  }
  func.func @transform_3(%arg0: i32) -> (i32, i32, i32) {
    %c0_i32 = arith.constant 0 : i32
    %c0_i32_0 = arith.constant 0 : i32
    %c0_i32_1 = arith.constant 0 : i32
    return %arg0, %c0_i32, %c0_i32_0 : i32, i32, i32
  }
}

</mosaic_0001>

<llo_original>
// kernel: tpu_custom_call.1
$region0: #{tpu_custom_call.1}
  #allocation0 [shape = 'u32[]', space=smem, size = 0x4, offset = 0x4, fixed_abs, tag = 'smem constant byte address 0x4 - core index']
  #allocation1 [shape = 'u32[144,128]{1,0:T(1,128)}', space=vmem, size = 0x12000, scoped, tag = 'internal scratch']
  %s0 = inlined_call_operand.hbm [shape: f32[2,16,128], index: 0, kind: input, shape index: {}]
  %s1 = inlined_call_operand.hbm [shape: f32[128,128], index: 1, kind: input, shape index: {}]
  %s2 = inlined_call_operand.vmem [shape: f32[1,128], index: 2, kind: input, shape index: {}]
  %s3 = inlined_call_operand.hbm [shape: f32[2,16,128], index: 3, kind: output, shape index: {}]
  %s4 = sld [smem:[#allocation0]]
  $region53: #{tpu_custom_call.1} parent=0
    _
  %s6 = ssub.s32 1, %s4
  %s7 = scalar_select 0, %s6, %s4
  $region1: #{tpu_custom_call.1} parent=0
    #allocation2 [shape = 'u8[16384]{0}', space=vmem, size = 0x4000, scoped, tag = 'input window, operand 0']
    #allocation3 [shape = 's32[2]{0}', space=sflag, size = 0x8, scoped, tag = 'scoped memory for tpu_custom_call.1']
    #allocation4 [shape = 's32[2]{0}', space=sflag, size = 0x8, scoped, tag = 'scoped memory for tpu_custom_call.1']
    #allocation5 [shape = 'u8[65536]{0}', space=vmem, size = 0x10000, scoped, tag = 'input window, operand 1, single buffered']
    #allocation6 [shape = 's32[1]{0}', space=sflag, size = 0x4, scoped, tag = 'scoped memory for tpu_custom_call.1']
    #allocation7 [shape = 'u8[16384]{0}', space=vmem, size = 0x4000, scoped, tag = 'output window, operand 0']
    %8 = vsyncpa [#allocation3], 0
    %s9 = scalar_lea.sflag [#allocation3], 1
    %10 = vsyncpa %s9, 0
    %11 = vsyncpa [#allocation6], 0
    %12 = vsyncpa [#allocation4], 0
    %s13 = scalar_lea.sflag [#allocation4], 1
    %14 = vsyncpa %s13, 0
    loop: start=0, step=1, limit=4
    $region2: #{tpu_custom_call.1} parent=1 // loop_pre_header
      _
    $region3: #{tpu_custom_call.1} parent=1 // loop_header
      %s16 = sphi 0, %s20
      %p17 = scmp.ge.s32.totalorder %s16, 4
      %s26 = sphi 0, %s28
      %s29 = sphi 0, %s26
      %s30 = sphi 0, %s29
      %s46 = sphi 0, %s30
      %s50 = sphi 0, %s50
      %s52 = sphi 0, %s50
      %s53 = sphi 0, %s52
      %s67 = sphi 0, %s53
      %s71 = sphi 0, %s71
      %s73 = sphi 0, %s71
      %s74 = sphi 0, %s73
      %s88 = sphi 0, %s74
      %s94 = sphi 0, %s96
      %s97 = sphi 0, %s94
      %s98 = sphi 0, %s97
      %s114 = sphi 0, %s98
    $region4: #{tpu_custom_call.1} parent=1 // loop_header_branch
      %19 = sbr.rel (%p17) target = $region8
    $region5: #{tpu_custom_call.1} parent=1 // loop_body
      %s21 = ssub.s32 %s16, 1
      %s22 = ssub.s32 %s16, 2
      %s23 = sadd.s32 %s16, 1
      %s24 = ssub.s32 %s16, %s23
      %p25 = scmp.eq.s32.totalorder %s24, 0
      %s27 = sadd.s32 %s26, 1
      %s28 = scalar_select %p25, %s26, %s27
      %p31 = pneg %p25
      %p32 = scmp.eq.s32.totalorder %s16, 1
      %p33 = por %p31, %p32
      %p34 = scmp.ne.s32.totalorder %s26, %s29
      %p35 = scmp.eq.s32.totalorder %s16, 0
      %p36 = por %p34, %p35
      %p37 = scmp.ne.s32.totalorder %s26, %s29
      %p38 = scmp.eq.s32.totalorder %s21, 1
      %p39 = por %p37, %p38
      %p40 = scmp.ne.s32.totalorder %s29, %s30
      %p41 = scmp.eq.s32.totalorder %s21, 0
      %p42 = por %p40, %p41
      %p43 = scmp.ne.s32.totalorder %s29, %s30
      %p44 = scmp.eq.s32.totalorder %s22, 1
      %p45 = por %p43, %p44
      %p47 = scmp.ne.s32.totalorder %s30, %s46
      %p48 = scmp.eq.s32.totalorder %s22, 0
      %p49 = por %p47, %p48
      %s51 = sadd.s32 %s50, 1
      %p54 = scmp.eq.s32.totalorder %s16, 1
      %p55 = scmp.ne.s32.totalorder %s50, %s52
      %p56 = scmp.eq.s32.totalorder %s16, 0
      %p57 = por %p55, %p56
      %p58 = scmp.ne.s32.totalorder %s50, %s52
      %p59 = scmp.eq.s32.totalorder %s21, 1
      %p60 = por %p58, %p59
      %p61 = scmp.ne.s32.totalorder %s52, %s53
      %p62 = scmp.eq.s32.totalorder %s21, 0
      %p63 = por %p61, %p62
      %p64 = scmp.ne.s32.totalorder %s52, %s53
      %p65 = scmp.eq.s32.totalorder %s22, 1
      %p66 = por %p64, %p65
      %p68 = scmp.ne.s32.totalorder %s53, %s67
      %p69 = scmp.eq.s32.totalorder %s22, 0
      %p70 = por %p68, %p69
      %s72 = sadd.s32 %s71, 1
      %p75 = scmp.eq.s32.totalorder %s16, 1
      %p76 = scmp.ne.s32.totalorder %s71, %s73
      %p77 = scmp.eq.s32.totalorder %s16, 0
      %p78 = por %p76, %p77
      %p79 = scmp.ne.s32.totalorder %s71, %s73
      %p80 = scmp.eq.s32.totalorder %s21, 1
      %p81 = por %p79, %p80
      %p82 = scmp.ne.s32.totalorder %s73, %s74
      %p83 = scmp.eq.s32.totalorder %s21, 0
      %p84 = por %p82, %p83
      %p85 = scmp.ne.s32.totalorder %s73, %s74
      %p86 = scmp.eq.s32.totalorder %s22, 1
      %p87 = por %p85, %p86
      %p89 = scmp.ne.s32.totalorder %s74, %s88
      %p90 = scmp.eq.s32.totalorder %s22, 0
      %p91 = por %p89, %p90
      %s92 = ssub.s32 %s16, %s23
      %p93 = scmp.eq.s32.totalorder %s92, 0
      %s95 = sadd.s32 %s94, 1
      %s96 = scalar_select %p93, %s94, %s95
      %p99 = pneg %p93
      %p100 = scmp.eq.s32.totalorder %s16, 1
      %p101 = por %p99, %p100
      %p102 = scmp.ne.s32.totalorder %s94, %s97
      %p103 = scmp.eq.s32.totalorder %s16, 0
      %p104 = por %p102, %p103
      %p105 = scmp.ne.s32.totalorder %s94, %s97
      %p106 = scmp.eq.s32.totalorder %s21, 1
      %p107 = por %p105, %p106
      %p108 = scmp.ne.s32.totalorder %s97, %s98
      %p109 = scmp.eq.s32.totalorder %s21, 0
      %p110 = por %p108, %p109
      %p111 = scmp.ne.s32.totalorder %s97, %s98
      %p112 = scmp.eq.s32.totalorder %s22, 1
      %p113 = por %p111, %p112
      %p115 = scmp.ne.s32.totalorder %s98, %s114
      %p116 = scmp.eq.s32.totalorder %s22, 0
      %p117 = por %p115, %p116
      %p118 = scmp.le.s32.totalorder 1, %s16
      %p119 = scmp.lt.s32.totalorder %s16, 3
      %p120 = pnand %p118, %p119
      %p121 = pneg %p120
      // Predicated region
      $region9: #{tpu_custom_call.1} parent=5 // pred_check
        _
      $region10: #{tpu_custom_call.1} parent=5 // pred_check_branch
        %123 = sbr.rel (%p120) target = $region12
      $region11: #{tpu_custom_call.1} parent=5 // pred_region
        %s124 = ssub.s32 %s16, 1
        // Predicated region
        $region13: #{tpu_custom_call.1} parent=11 // pred_check
          %p125 = pneg %p63
        $region14: #{tpu_custom_call.1} parent=11 // pred_check_branch
          %127 = sbr.rel (%p125) target = $region16
        $region15: #{tpu_custom_call.1} parent=11 // pred_region
          %s129 = ssub.s32 2048, 2048
          %130 = vsyncadd [#allocation6], %s129
          %s131 = sshll.u32 [#allocation5], 4
          %s132 = int_to_ptr.vmem [resolvable:$true] %s131
          %137 = dma.hbm_to_vmem [thread:$0]  %s1, 2048, %s132, [#allocation6], 128, 128, 8
        $region16: #{tpu_custom_call.1} parent=11 // pred_fallthru
          _
        // Predicated region
        $region17: #{tpu_custom_call.1} parent=11 // pred_check
          %p138 = pneg %p84
        $region18: #{tpu_custom_call.1} parent=11 // pred_check_branch
          %140 = sbr.rel (%p138) target = $region20
        $region19: #{tpu_custom_call.1} parent=11 // pred_region
          _
        $region20: #{tpu_custom_call.1} parent=11 // pred_fallthru
          _
      $region12: #{tpu_custom_call.1} parent=5 // pred_fallthru
        _
      %p141 = scmp.lt.s32.totalorder %s16, 2
      // Predicated region
      $region21: #{tpu_custom_call.1} parent=5 // pred_check
        %p142 = pneg %p141
      $region22: #{tpu_custom_call.1} parent=5 // pred_check_branch
        %144 = sbr.rel (%p142) target = $region24
      $region23: #{tpu_custom_call.1} parent=5 // pred_region
        // Predicated region
        $region25: #{tpu_custom_call.1} parent=23 // pred_check
          %p145 = pneg %p36
        $region26: #{tpu_custom_call.1} parent=23 // pred_check_branch
          %147 = sbr.rel (%p145) target = $region28
        $region27: #{tpu_custom_call.1} parent=23 // pred_region
          %s148 = sand.u32 %s26, 1
          %s149 = scalar_lea.sflag [#allocation3], %s148
          %s150 = sand.u32 %s26, 1
          %s151 = smul.addr %s150, 16
          %s152 = scalar_lea.vmem [#allocation2], %s151
          %s154 = ssub.s32 256, 256
          %155 = vsyncadd %s149, %s154
          %s156 = smul.addr %s16, 2
          %s157 = smul.addr %s156, 128
          %s158 = scalar_lea.hbm %s0, %s157
          %s159 = sshll.u32 %s152, 4
          %s160 = int_to_ptr.vmem [resolvable:$true] %s159
          %165 = dma.hbm_to_vmem [thread:$0]  %s158, 256, %s160, %s149, 128, 128, 8
        $region28: #{tpu_custom_call.1} parent=23 // pred_fallthru
          _
      $region24: #{tpu_custom_call.1} parent=5 // pred_fallthru
        _
      %p166 = scmp.le.s32.totalorder 1, %s16
      %p167 = scmp.lt.s32.totalorder %s16, 3
      %p168 = pnand %p166, %p167
      %p169 = pneg %p168
      // Predicated region
      $region29: #{tpu_custom_call.1} parent=5 // pred_check
        _
      $region30: #{tpu_custom_call.1} parent=5 // pred_check_branch
        %171 = sbr.rel (%p168) target = $region32
      $region31: #{tpu_custom_call.1} parent=5 // pred_region
        %s172 = ssub.s32 %s16, 1
        %s173 = sand.u32 %s29, 1
        %s174 = scalar_lea.sflag [#allocation3], %s173
        %s175 = sand.u32 %s29, 1
        %s176 = smul.addr %s175, 16
        %s177 = scalar_lea.vmem [#allocation2], %s176
        // Predicated region
        $region33: #{tpu_custom_call.1} parent=31 // pred_check
          %p178 = pneg %p42
        $region34: #{tpu_custom_call.1} parent=31 // pred_check_branch
          %180 = sbr.rel (%p178) target = $region36
        $region35: #{tpu_custom_call.1} parent=31 // pred_region
          %181 = dma.done %s174, 256
        $region36: #{tpu_custom_call.1} parent=31 // pred_fallthru
          _
        // Predicated region
        $region37: #{tpu_custom_call.1} parent=31 // pred_check
          %p182 = pneg %p63
        $region38: #{tpu_custom_call.1} parent=31 // pred_check_branch
          %184 = sbr.rel (%p182) target = $region40
        $region39: #{tpu_custom_call.1} parent=31 // pred_region
          %185 = dma.done [#allocation6], 2048
        $region40: #{tpu_custom_call.1} parent=31 // pred_fallthru
          _
        %s186 = sand.u32 %s29, 1
        %s187 = scalar_lea.sflag [#allocation3], %s186
        %s188 = sand.u32 %s29, 1
        %s189 = smul.addr %s188, 16
        %s190 = scalar_lea.vmem [#allocation2], %s189
        %p191 = pneg %p42
        %p192 = pneg %p39
        %p193 = pneg %p63
        %p194 = pneg %p60
        %p195 = pneg %p84
        %p196 = pneg %p81
        %p197 = pneg %p110
        %p198 = pneg %p107
        %s199 = sand.u32 %s97, 1
        %s200 = scalar_lea.sflag [#allocation4], %s199
        %s201 = sand.u32 %s97, 1
        %s202 = smul.addr %s201, 16
        %s203 = scalar_lea.vmem [#allocation7], %s202
        %v204 = vld [vmem:[%s177] sm:$0xff]
        %v205 = vld [vmem:[%s177 + $0x8] sm:$0xff]
        %v206 = vld [vmem:[#allocation5] sm:$0xff]
        %v207 = vld [vmem:[#allocation5 + $0x8] sm:$0xff]
        %v208 = vld [vmem:[#allocation5 + $0x10] sm:$0xff]
        %v209 = vld [vmem:[#allocation5 + $0x18] sm:$0xff]
        %v210 = vld [vmem:[#allocation5 + $0x20] sm:$0xff]
        %v211 = vld [vmem:[#allocation5 + $0x28] sm:$0xff]
        %v212 = vld [vmem:[#allocation5 + $0x30] sm:$0xff]
        %v213 = vld [vmem:[#allocation5 + $0x38] sm:$0xff]
        %v214 = vld [vmem:[#allocation5 + $0x40] sm:$0xff]
        %v215 = vld [vmem:[#allocation5 + $0x48] sm:$0xff]
        %v216 = vld [vmem:[#allocation5 + $0x50] sm:$0xff]
        %v217 = vld [vmem:[#allocation5 + $0x58] sm:$0xff]
        %v218 = vld [vmem:[#allocation5 + $0x60] sm:$0xff]
        %v219 = vld [vmem:[#allocation5 + $0x68] sm:$0xff]
        %v220 = vld [vmem:[#allocation5 + $0x70] sm:$0xff]
        %v221 = vld [vmem:[#allocation5 + $0x78] sm:$0xff]
        %v222 = vld [vmem:[%s2] sm:$0x1]
        %v224 = vlaneseq
        %v225 = vshrl.u32 %v224, 7
        %v226 = vsub.s32 0, %v225
        %v227 = vrot.slane %v222, %v226
        %229 = vmatprep.subr.mxu0 0.0
        %230 = vmatpush1.msra.mxu0 %v221
        %231 = vmatprep.subr.mxu0 0.0
        %232 = vmatpush1.msra.mxu0 %v220
        %233 = vmatprep.subr.mxu0 0.0
        %234 = vmatpush1.msra.mxu0 %v219
        %235 = vmatprep.subr.mxu0 0.0
        %236 = vmatpush1.msra.mxu0 %v218
        %237 = vmatprep.subr.mxu0 0.0
        %238 = vmatpush1.msra.mxu0 %v217
        %239 = vmatprep.subr.mxu0 0.0
        %240 = vmatpush1.msra.mxu0 %v216
        %241 = vmatprep.subr.mxu0 0.0
        %242 = vmatpush1.msra.mxu0 %v215
        %243 = vmatprep.subr.mxu0 0.0
        %244 = vmatpush1.msra.mxu0 %v214
        %245 = vmatprep.subr.mxu0 0.0
        %246 = vmatpush1.msra.mxu0 %v213
        %247 = vmatprep.subr.mxu0 0.0
        %248 = vmatpush1.msra.mxu0 %v212
        %249 = vmatprep.subr.mxu0 0.0
        %250 = vmatpush1.msra.mxu0 %v211
        %251 = vmatprep.subr.mxu0 0.0
        %252 = vmatpush1.msra.mxu0 %v210
        %253 = vmatprep.subr.mxu0 0.0
        %254 = vmatpush1.msra.mxu0 %v209
        %255 = vmatprep.subr.mxu0 0.0
        %256 = vmatpush1.msra.mxu0 %v208
        %257 = vmatprep.subr.mxu0 0.0
        %258 = vmatpush1.msra.mxu0 %v207
        %259 = vmatprep.subr.mxu0 0.0
        %260 = vmatpush1.msra.mxu0 %v206
        %261 = vmatprep.subr.mxu0 0.0
        %262 = vmatpush2.msra.mxu0 0.0
        %263 = vmatprep.subr.mxu0 0.0
        %264 = vmatpush2.msra.mxu0 0.0
        %265 = vmatprep.subr.mxu0 0.0
        %266 = vmatpush2.msra.mxu0 0.0
        %267 = vmatprep.subr.mxu0 0.0
        %268 = vmatpush2.msra.mxu0 0.0
        %269 = vmatprep.subr.mxu0 0.0
        %270 = vmatpush2.msra.mxu0 0.0
        %271 = vmatprep.subr.mxu0 0.0
        %272 = vmatpush2.msra.mxu0 0.0
        %273 = vmatprep.subr.mxu0 0.0
        %274 = vmatpush2.msra.mxu0 0.0
        %275 = vmatprep.subr.mxu0 0.0
        %276 = vmatpush2.msra.mxu0 0.0
        %277 = vmatprep.subr.mxu0 0.0
        %278 = vmatpush2.msra.mxu0 0.0
        %279 = vmatprep.subr.mxu0 0.0
        %280 = vmatpush2.msra.mxu0 0.0
        %281 = vmatprep.subr.mxu0 0.0
        %282 = vmatpush2.msra.mxu0 0.0
        %283 = vmatprep.subr.mxu0 0.0
        %284 = vmatpush2.msra.mxu0 0.0
        %285 = vmatprep.subr.mxu0 0.0
        %286 = vmatpush2.msra.mxu0 0.0
        %287 = vmatprep.subr.mxu0 0.0
        %288 = vmatpush2.msra.mxu0 0.0
        %289 = vmatprep.subr.mxu0 0.0
        %290 = vmatpush2.msra.mxu0 0.0
        %291 = vmatprep.subr.mxu0 0.0
        %292 = vmatpush2.msra.mxu0 0.0
        %293 = vmatprep.mubr.f32.mxu0 0.0
        %294 = vmatmul.mubr.f32.gmra.mxu0 %v204
        %v295 = vpop.f32.mrf.mxu0
        %v296 = vadd.f32 %v227, %v295
        %v297 = vpop.f32.mrf.mxu0
        %298 = vmatprep.mubr.f32.mxu0 0.0
        %299 = vmatmul.mubr.f32.gmra.mxu0 %v205
        %v300 = vpop.f32.mrf.mxu0
        %v301 = vadd.f32 %v227, %v300
        %v302 = vpop.f32.mrf.mxu0
        %303 = vdwg.mxu0
        %304 = vst [vmem:[%s203] sm:$0xff] %v296
        %305 = vst [vmem:[%s203 + $0x8] sm:$0xff] %v301
        %s306 = sand.u32 %s97, 1
        %s307 = scalar_lea.sflag [#allocation4], %s306
        %s308 = sand.u32 %s97, 1
        %s309 = smul.addr %s308, 16
        %s310 = scalar_lea.vmem [#allocation7], %s309
        // Predicated region
        $region41: #{tpu_custom_call.1} parent=31 // pred_check
          %p311 = pneg %p107
        $region42: #{tpu_custom_call.1} parent=31 // pred_check_branch
          %313 = sbr.rel (%p311) target = $region44
        $region43: #{tpu_custom_call.1} parent=31 // pred_region
          %s315 = ssub.s32 256, 256
          %316 = vsyncadd %s307, %s315
          %s317 = smul.addr %s21, 2
          %s318 = smul.addr %s317, 128
          %s319 = scalar_lea.hbm %s3, %s318
          %s320 = sshll.u32 %s310, 4
          %s321 = int_to_ptr.vmem [resolvable:$true] %s320
          %326 = dma.vmem_to_hbm [thread:$0]  %s321, 256, %s319, %s307, 128, 128, 8
        $region44: #{tpu_custom_call.1} parent=31 // pred_fallthru
          _
      $region32: #{tpu_custom_call.1} parent=5 // pred_fallthru
        _
      %p327 = scmp.le.s32.totalorder 2, %s16
      // Predicated region
      $region45: #{tpu_custom_call.1} parent=5 // pred_check
        %p328 = pneg %p327
      $region46: #{tpu_custom_call.1} parent=5 // pred_check_branch
        %330 = sbr.rel (%p328) target = $region48
      $region47: #{tpu_custom_call.1} parent=5 // pred_region
        %s331 = ssub.s32 %s16, 2
        // Predicated region
        $region49: #{tpu_custom_call.1} parent=47 // pred_check
          %p332 = pneg %p113
        $region50: #{tpu_custom_call.1} parent=47 // pred_check_branch
          %334 = sbr.rel (%p332) target = $region52
        $region51: #{tpu_custom_call.1} parent=47 // pred_region
          %s335 = sand.u32 %s98, 1
          %s336 = scalar_lea.sflag [#allocation4], %s335
          %s337 = sand.u32 %s98, 1
          %s338 = smul.addr %s337, 16
          %s339 = scalar_lea.vmem [#allocation7], %s338
          %340 = dma.done %s336, 256
        $region52: #{tpu_custom_call.1} parent=47 // pred_fallthru
          _
      $region48: #{tpu_custom_call.1} parent=5 // pred_fallthru
        _
    $region6: #{tpu_custom_call.1} parent=1 // loop_footer
      %s20 = sadd.s32 1, %s16
    $region7: #{tpu_custom_call.1} parent=1 // loop_footer_branch
      %15 = sbr.rel target = $region3
    $region8: #{tpu_custom_call.1} parent=1 // loop_exit
      _
    %341 = vsyncpa [#allocation3], 1
    %s342 = scalar_lea.sflag [#allocation3], 1
    %343 = vsyncpa %s342, 1
    %344 = vsyncpa [#allocation6], 1
    %345 = vsyncpa [#allocation4], 1
    %s346 = scalar_lea.sflag [#allocation4], 1
    %347 = vsyncpa %s346, 1

</llo_original>
